<compile_context>
chip_gen: v7x
topology: tpu7x:2x2x1
jax: 0.10.0
libtpu: 0.0.40
codegen_flags: <defaults>
</compile_context>

<pallas_src>
import math
import numpy as np
import jax
import jax.numpy as jnp
from jax.experimental import pallas as pl
from jax.experimental.pallas import tpu as pltpu

DIM_FEATURE = 16   # N: number of positions (pos_embed rows), i.e. x.shape[1]
DIM_ATTN = 32      # D: attention projection width
BATCH = 2

_LANE = 128        # TPU vreg lane width
_MAX_TILE = 1024   # max batch columns per grid step (~1 KiB of f32 (N,N) temporaries
                   # per column -> a few MiB/step, well inside scoped VMEM on all gens)


def self_attention_kernel(xt_ref, params_ref, pe_ref, out_ref):
    # Lane-dense layout: batch is the last (128-lane) axis.
    xt = xt_ref[...].astype(jnp.float32)            # (N, Bt)   x[n, b]
    params = params_ref[...].astype(jnp.float32)    # (4, D) = [wq; bq; wk; bk]
    pe = pe_ref[...].astype(jnp.float32)            # (N, D)

    wq, bq = params[0:1, :], params[1:2, :]         # (1, D)
    wk, bk = params[2:3, :], params[3:4, :]         # (1, D)

    D = pe.shape[-1]
    scale = 1.0 / math.sqrt(D)

    # Hoisted, batch-independent constants (computed once per grid step).
    pe_q = pe + bq                                  # (N, D)
    pe_k = pe + bk                                  # (N, D)

    # Rank-1 decomposition constants with the 1/sqrt(D) scale folded in.
    # Shapes are chosen so they broadcast directly against the (N, N, Bt) score
    # tensor with no in-kernel reshapes/relayouts. These are tiny lane-reduces
    # on the VPU/XLU; a degenerate 16x32x16 MXU matmul is not worth it.
    c0 = jnp.sum(wq[None, :, :] * wk[None, :, :], axis=-1, keepdims=True) * scale   # (1, 1, 1)
    a = jnp.sum(pe_k[None, :, :] * wq[None, :, :], axis=-1, keepdims=True) * scale  # (1, N, 1) [m]
    c = jnp.sum(pe_q[:, None, :] * wk[None, :, :], axis=-1, keepdims=True) * scale  # (N, 1, 1) [n]
    C = jnp.sum(pe_q[:, None, :] * pe_k[None, :, :], axis=-1, keepdims=True) * scale  # (N, N, 1)

    xn = xt[:, None, :]                             # (N, 1, Bt)  x[n, b]
    xm = xt[None, :, :]                             # (1, N, Bt)  x[m, b]

    # s[n, m, b] = c0*x[n,b]*x[m,b] + a[m]*x[n,b] + c[n]*x[m,b] + C[n,m]
    s = xn * (c0 * xm + a) + c * xm + C             # (N, N, Bt)

    # Numerically stable softmax over the key axis m (axis=1); normalization is
    # deferred to the output.
    m_max = jnp.max(s, axis=1, keepdims=True)       # (N, 1, Bt)
    p = jnp.exp(s - m_max)                          # (N, N, Bt)
    l = jnp.sum(p, axis=1)                          # (N, Bt)

    # attn @ v with v = x (width-1 value): weighted reduce over m, then a single
    # (N, Bt) multiply by 1/l instead of dividing the full (N, N, Bt) tensor.
    # (approx=True would move this fully onto the EUP; kept exact to stay well
    # inside the 1e-3 validation tolerance.)
    num = jnp.sum(p * xm, axis=1)                   # (N, Bt)
    out = num * pl.reciprocal(l)                    # (N, Bt)
    out_ref[...] = out.astype(out_ref.dtype)


def _batch_tiling(batch):
    """Pick (padded_batch, batch_tile) for the lane (last) axis."""
    if batch <= 2 * _LANE:
        # Small batch: a single grid step over the whole batch. A block that
        # spans the full array dim has no 128-lane alignment requirement.
        return batch, batch
    # Large batch: lane-aligned tiles, at least 2 grid steps (the grid axis is
    # "parallel", so v7x's two TensorCores both get work), capped at _MAX_TILE
    # so the (N, N, b_tile) f32 score/softmax temporaries stay VMEM-friendly on
    # every generation (v7x's 64 MiB VMEM included).
    b_tile = min(_MAX_TILE, ((batch + 2 * _LANE - 1) // (2 * _LANE)) * _LANE)
    b_pad = ((batch + b_tile - 1) // b_tile) * b_tile
    return b_pad, b_tile


def self_attention_forward(x, wq, bq, wk, bk, pos_embed):
    """x: (B, N) f32. wq/bq/wk/bk: (D,). pos_embed: (N, D). Returns (B, N) f32."""
    B, N = x.shape
    D = pos_embed.shape[-1]

    # Pack the four tiny 1->D projection parameters into one (4, D) array:
    # a single DMA / double-buffered VMEM block instead of four.
    params = jnp.stack([wq, bq, wk, bk], axis=0).astype(jnp.float32)

    # Lane-dense layout: put batch on the last (lane) axis; pad to the tile.
    b_pad, b_tile = _batch_tiling(B)
    x_t = x.astype(jnp.float32).T                   # (N, B)
    if b_pad != B:
        x_t = jnp.pad(x_t, ((0, 0), (0, b_pad - B)))  # padded cols are discarded

    grid = (b_pad // b_tile,)
    batch_spec = pl.BlockSpec((N, b_tile), lambda i: (0, i))
    params_spec = pl.BlockSpec((4, D), lambda i: (0, 0))
    pe_spec = pl.BlockSpec((N, D), lambda i: (0, 0))

    out_t = pl.pallas_call(
        self_attention_kernel,
        out_shape=jax.ShapeDtypeStruct((N, b_pad), jnp.float32),
        grid=grid,
        in_specs=[batch_spec, params_spec, pe_spec],
        out_specs=batch_spec,
        compiler_params=pltpu.CompilerParams(
            dimension_semantics=("parallel",)),
    )(x_t, params, pos_embed)

    return out_t[:, :B].T


def reference_forward(x, wq, bq, wk, bk, pos_embed):
    """Pure-JAX reference of the PyTorch forward (eval mode, no mask/dropout)."""
    D = pos_embed.shape[-1]
    q = x[..., None] * wq[None, None, :] + bq[None, None, :] + pos_embed[None]
    k = x[..., None] * wk[None, None, :] + bk[None, None, :] + pos_embed[None]
    s = jnp.einsum('bnd,bmd->bnm', q, k,
                   precision=jax.lax.Precision.HIGHEST) / jnp.sqrt(jnp.float32(D))
    a = jax.nn.softmax(s, axis=-1)
    return jnp.einsum('bnm,bm->bn', a, x, precision=jax.lax.Precision.HIGHEST)


if __name__ == "__main__":
    key = jax.random.PRNGKey(0)
    k_x, k_wq, k_bq, k_wk, k_bk, k_pe = jax.random.split(key, 6)

    x = jax.random.normal(k_x, (BATCH, DIM_FEATURE), jnp.float32)
    # nn.Linear(1, D): weight (D, 1) stored here squeezed to (D,); bias (D,)
    wq = 0.5 * jax.random.normal(k_wq, (DIM_ATTN,), jnp.float32)
    bq = 0.1 * jax.random.normal(k_bq, (DIM_ATTN,), jnp.float32)
    wk = 0.5 * jax.random.normal(k_wk, (DIM_ATTN,), jnp.float32)
    bk = 0.1 * jax.random.normal(k_bk, (DIM_ATTN,), jnp.float32)
    # nn.Embedding(dim_feature, dim_attn) weight table (lookup of arange(N) == full table)
    pos_embed = 0.5 * jax.random.normal(k_pe, (DIM_FEATURE, DIM_ATTN), jnp.float32)

    out = self_attention_forward(x, wq, bq, wk, bk, pos_embed)
    out = jax.block_until_ready(out)

    ref = reference_forward(x, wq, bq, wk, bk, pos_embed)
    # The rank-1 decomposition changes summation order vs the HIGHEST-precision
    # XLA reference; for O(1) inputs the error is << 1e-3. Real bugs (wrong
    # scale / missing bias / wrong softmax axis) are orders of magnitude larger.
    np.testing.assert_allclose(np.asarray(out), np.asarray(ref), rtol=1e-3, atol=1e-3)
    assert out.shape == (BATCH, DIM_FEATURE)
    print("KERNEL_OK")
</pallas_src>

<mosaic_0001>
module attributes {stable_mosaic.version = 11 : i64} {
  func.func @self_attention_kernel(%arg0: i32, %arg1: memref<16x2xf32, #tpu.memory_space<vmem>>, %arg2: memref<4x32xf32, #tpu.memory_space<vmem>>, %arg3: memref<16x32xf32, #tpu.memory_space<vmem>>, %arg4: memref<16x2xf32, #tpu.memory_space<vmem>>) attributes {dimension_semantics = [#tpu.dimension_semantics<parallel>], iteration_bounds = array<i64: 1>, scalar_prefetch = 0 : i64, scratch_operands = 0 : i64, tpu.core_type = #tpu.core_type<tc>, window_params = [{transform_indices = @transform_0, window_bounds = array<i64: 16, 2>}, {pipeline_mode = #tpu.pipeline_mode<synchronous>, transform_indices = @transform_1, window_bounds = array<i64: 4, 32>}, {pipeline_mode = #tpu.pipeline_mode<synchronous>, transform_indices = @transform_2, window_bounds = array<i64: 16, 32>}, {transform_indices = @transform_3, window_bounds = array<i64: 16, 2>}]} {
    %c0 = arith.constant 0 : index
    %c0_0 = arith.constant 0 : index
    %0 = vector.load %arg1[%c0, %c0_0] : memref<16x2xf32, #tpu.memory_space<vmem>>, vector<16x2xf32>
    %c0_1 = arith.constant 0 : index
    %c0_2 = arith.constant 0 : index
    %1 = vector.load %arg2[%c0_1, %c0_2] : memref<4x32xf32, #tpu.memory_space<vmem>>, vector<4x32xf32>
    %c0_3 = arith.constant 0 : index
    %c0_4 = arith.constant 0 : index
    %2 = vector.load %arg3[%c0_3, %c0_4] : memref<16x32xf32, #tpu.memory_space<vmem>>, vector<16x32xf32>
    %3 = vector.extract_strided_slice %1 {offsets = [0, 0], sizes = [1, 32], strides = [1, 1]} : vector<4x32xf32> to vector<1x32xf32>
    %4 = vector.extract_strided_slice %1 {offsets = [1, 0], sizes = [1, 32], strides = [1, 1]} : vector<4x32xf32> to vector<1x32xf32>
    %5 = vector.extract_strided_slice %1 {offsets = [2, 0], sizes = [1, 32], strides = [1, 1]} : vector<4x32xf32> to vector<1x32xf32>
    %6 = vector.extract_strided_slice %1 {offsets = [3, 0], sizes = [1, 32], strides = [1, 1]} : vector<4x32xf32> to vector<1x32xf32>
    %7 = vector.broadcast %4 : vector<1x32xf32> to vector<16x32xf32>
    %8 = arith.addf %2, %7 : vector<16x32xf32>
    %9 = vector.broadcast %6 : vector<1x32xf32> to vector<16x32xf32>
    %10 = arith.addf %2, %9 : vector<16x32xf32>
    %11 = vector.shape_cast %3 : vector<1x32xf32> to vector<1x1x32xf32>
    %12 = vector.shape_cast %5 : vector<1x32xf32> to vector<1x1x32xf32>
    %13 = arith.mulf %11, %12 : vector<1x1x32xf32>
    %cst = arith.constant dense<0.000000e+00> : vector<1x1xf32>
    %14 = vector.multi_reduction <add>, %13, %cst [2] : vector<1x1x32xf32> to vector<1x1xf32>
    %15 = vector.shape_cast %14 : vector<1x1xf32> to vector<1x1x1xf32>
    %cst_5 = arith.constant 0.176776692 : f32
    %16 = vector.broadcast %cst_5 : f32 to vector<1x1x1xf32>
    %17 = arith.mulf %15, %16 : vector<1x1x1xf32>
    %18 = vector.shape_cast %10 : vector<16x32xf32> to vector<1x16x32xf32>
    %19 = vector.shape_cast %3 : vector<1x32xf32> to vector<1x1x32xf32>
    %20 = vector.broadcast %19 : vector<1x1x32xf32> to vector<1x16x32xf32>
    %21 = arith.mulf %18, %20 : vector<1x16x32xf32>
    %cst_6 = arith.constant dense<0.000000e+00> : vector<1x16xf32>
    %22 = vector.multi_reduction <add>, %21, %cst_6 [2] : vector<1x16x32xf32> to vector<1x16xf32>
    %23 = vector.shape_cast %22 : vector<1x16xf32> to vector<1x16x1xf32>
    %cst_7 = arith.constant 0.176776692 : f32
    %24 = vector.broadcast %cst_7 : f32 to vector<1x16x1xf32>
    %25 = arith.mulf %23, %24 : vector<1x16x1xf32>
    %26 = vector.shape_cast %8 : vector<16x32xf32> to vector<16x1x32xf32>
    %27 = vector.shape_cast %5 : vector<1x32xf32> to vector<1x1x32xf32>
    %28 = vector.broadcast %27 : vector<1x1x32xf32> to vector<16x1x32xf32>
    %29 = arith.mulf %26, %28 : vector<16x1x32xf32>
    %cst_8 = arith.constant dense<0.000000e+00> : vector<16x1xf32>
    %30 = vector.multi_reduction <add>, %29, %cst_8 [2] : vector<16x1x32xf32> to vector<16x1xf32>
    %31 = vector.shape_cast %30 : vector<16x1xf32> to vector<16x1x1xf32>
    %cst_9 = arith.constant 0.176776692 : f32
    %32 = vector.broadcast %cst_9 : f32 to vector<16x1x1xf32>
    %33 = arith.mulf %31, %32 : vector<16x1x1xf32>
    %34 = vector.shape_cast %8 : vector<16x32xf32> to vector<16x1x32xf32>
    %35 = vector.shape_cast %10 : vector<16x32xf32> to vector<1x16x32xf32>
    %36 = vector.broadcast %34 : vector<16x1x32xf32> to vector<16x16x32xf32>
    %37 = vector.broadcast %35 : vector<1x16x32xf32> to vector<16x16x32xf32>
    %38 = arith.mulf %36, %37 : vector<16x16x32xf32>
    %cst_10 = arith.constant dense<0.000000e+00> : vector<16x16xf32>
    %39 = vector.multi_reduction <add>, %38, %cst_10 [2] : vector<16x16x32xf32> to vector<16x16xf32>
    %40 = vector.shape_cast %39 : vector<16x16xf32> to vector<16x16x1xf32>
    %cst_11 = arith.constant 0.176776692 : f32
    %41 = vector.broadcast %cst_11 : f32 to vector<16x16x1xf32>
    %42 = arith.mulf %40, %41 : vector<16x16x1xf32>
    %43 = vector.shape_cast %0 : vector<16x2xf32> to vector<16x1x2xf32>
    %44 = vector.shape_cast %0 : vector<16x2xf32> to vector<1x16x2xf32>
    %45 = vector.broadcast %17 : vector<1x1x1xf32> to vector<1x16x2xf32>
    %46 = arith.mulf %45, %44 : vector<1x16x2xf32>
    %47 = vector.broadcast %25 : vector<1x16x1xf32> to vector<1x16x2xf32>
    %48 = arith.addf %46, %47 : vector<1x16x2xf32>
    %49 = vector.broadcast %43 : vector<16x1x2xf32> to vector<16x16x2xf32>
    %50 = vector.broadcast %48 : vector<1x16x2xf32> to vector<16x16x2xf32>
    %51 = arith.mulf %49, %50 : vector<16x16x2xf32>
    %52 = vector.broadcast %33 : vector<16x1x1xf32> to vector<16x16x2xf32>
    %53 = vector.broadcast %44 : vector<1x16x2xf32> to vector<16x16x2xf32>
    %54 = arith.mulf %52, %53 : vector<16x16x2xf32>
    %55 = arith.addf %51, %54 : vector<16x16x2xf32>
    %56 = vector.broadcast %42 : vector<16x16x1xf32> to vector<16x16x2xf32>
    %57 = arith.addf %55, %56 : vector<16x16x2xf32>
    %cst_12 = arith.constant dense<0xFF800000> : vector<16x2xf32>
    %58 = vector.multi_reduction <maximumf>, %57, %cst_12 [1] : vector<16x16x2xf32> to vector<16x2xf32>
    %59 = vector.shape_cast %58 : vector<16x2xf32> to vector<16x1x2xf32>
    %60 = vector.broadcast %59 : vector<16x1x2xf32> to vector<16x16x2xf32>
    %61 = arith.subf %57, %60 : vector<16x16x2xf32>
    %62 = math.exp %61 : vector<16x16x2xf32>
    %cst_13 = arith.constant dense<0.000000e+00> : vector<16x2xf32>
    %63 = vector.multi_reduction <add>, %62, %cst_13 [1] : vector<16x16x2xf32> to vector<16x2xf32>
    %64 = vector.broadcast %44 : vector<1x16x2xf32> to vector<16x16x2xf32>
    %65 = arith.mulf %62, %64 : vector<16x16x2xf32>
    %cst_14 = arith.constant dense<0.000000e+00> : vector<16x2xf32>
    %66 = vector.multi_reduction <add>, %65, %cst_14 [1] : vector<16x16x2xf32> to vector<16x2xf32>
    %67 = tpu.reciprocal %63 : vector<16x2xf32> -> vector<16x2xf32>
    %68 = arith.mulf %66, %67 : vector<16x2xf32>
    %c0_15 = arith.constant 0 : index
    %c0_16 = arith.constant 0 : index
    %69 = vector.load %arg4[%c0_15, %c0_16] : memref<16x2xf32, #tpu.memory_space<vmem>>, vector<16x2xf32>
    tpu.vector_store %arg4[%c0_15, %c0_16], %68 {strides = array<i32>} : memref<16x2xf32, #tpu.memory_space<vmem>>, vector<16x2xf32>,
    return
  }
  func.func @transform_0(%arg0: i32) -> (i32, i32) {
    %c0_i32 = arith.constant 0 : i32
    %c0_i32_0 = arith.constant 0 : i32
    return %c0_i32, %arg0 : i32, i32
  }
  func.func @transform_1(%arg0: i32) -> (i32, i32) {
    %c0_i32 = arith.constant 0 : i32
    %c0_i32_0 = arith.constant 0 : i32
    %c0_i32_1 = arith.constant 0 : i32
    return %c0_i32, %c0_i32_0 : i32, i32
  }
  func.func @transform_2(%arg0: i32) -> (i32, i32) {
    %c0_i32 = arith.constant 0 : i32
    %c0_i32_0 = arith.constant 0 : i32
    %c0_i32_1 = arith.constant 0 : i32
    return %c0_i32, %c0_i32_0 : i32, i32
  }
  func.func @transform_3(%arg0: i32) -> (i32, i32) {
    %c0_i32 = arith.constant 0 : i32
    %c0_i32_0 = arith.constant 0 : i32
    return %c0_i32, %arg0 : i32, i32
  }
}

</mosaic_0001>

<llo_original>
// kernel: tpu_custom_call.1
$region0: #{tpu_custom_call.1}
  #allocation0 [shape = 'u32[]', space=smem, size = 0x4, offset = 0x4, fixed_abs, tag = 'smem constant byte address 0x4 - core index']
  #allocation1 [shape = 'u32[144,128]{1,0:T(1,128)}', space=vmem, size = 0x12000, scoped, tag = 'internal scratch']
  %s0 = inlined_call_operand.vmem [shape: f32[16,2], index: 0, kind: input, shape index: {}]
  %s1 = inlined_call_operand.vmem [shape: f32[4,32], index: 1, kind: input, shape index: {}]
  %s2 = inlined_call_operand.vmem [shape: f32[16,32], index: 2, kind: input, shape index: {}]
  %s3 = inlined_call_operand.vmem [shape: f32[16,2], index: 3, kind: output, shape index: {}]
  %s4 = sld [smem:[#allocation0]]
  $region22: #{tpu_custom_call.1} parent=0
    _
  %s6 = ssub.s32 1, %s4
  %s7 = scalar_select 0, %s6, %s4
  // Predicated region
  $region2: #{tpu_custom_call.1} parent=0 // pred_check
    _
  $region3: #{tpu_custom_call.1} parent=0 // pred_check_branch
    %9 = sbr.rel (0) target = $region5
  $region4: #{tpu_custom_call.1} parent=0 // pred_region
    _
  $region5: #{tpu_custom_call.1} parent=0 // pred_fallthru
    _
  // Predicated region
  $region6: #{tpu_custom_call.1} parent=0 // pred_check
    _
  $region7: #{tpu_custom_call.1} parent=0 // pred_check_branch
    %11 = sbr.rel (0) target = $region9
  $region8: #{tpu_custom_call.1} parent=0 // pred_region
    _
  $region9: #{tpu_custom_call.1} parent=0 // pred_fallthru
    _
  // Predicated region
  $region10: #{tpu_custom_call.1} parent=0 // pred_check
    _
  $region11: #{tpu_custom_call.1} parent=0 // pred_check_branch
    %13 = sbr.rel (0) target = $region13
  $region12: #{tpu_custom_call.1} parent=0 // pred_region
    _
  $region13: #{tpu_custom_call.1} parent=0 // pred_fallthru
    _
  %v14 = vld [vmem:[%s0] sm:$0xff]
  %v15 = vld [vmem:[%s0 + $0x8] sm:$0xff]
  %v16 = vld [vmem:[%s1] sm:$0xf]
  %v17 = vld [vmem:[%s2] sm:$0xff]
  %v18 = vld [vmem:[%s2 + $0x8] sm:$0xff]
  %v19 = vlaneseq
  %v20 = vshrl.u32 %v19, 7
  %v21 = vsub.s32 1, %v20
  %v22 = vrot.slane %v16, %v21
  %v23 = vadd.f32 %v17, %v22
  %v24 = vadd.f32 %v18, %v22
  %v25 = vlaneseq
  %v26 = vshrl.u32 %v25, 7
  %v27 = vsub.s32 3, %v26
  %v28 = vrot.slane %v16, %v27
  %v29 = vadd.f32 %v17, %v28
  %v30 = vadd.f32 %v18, %v28
  %v32 = vrot.slane %v16, 2
  %v34 = vmul.f32 %v16, %v32
  %vm35 = vcmask 253952
  %v36 = vsel %vm35, %v34, 0.0
  %37 = vadd.xlane.f32.xlu0 %v36
  %v38 = vpop.xlane.xlu0 %37
  %v39 = vmul.f32 %v38, 0.17677669
  %v40 = vlaneseq
  %v41 = vshrl.u32 %v40, 7
  %v42 = vsub.s32 0, %v41
  %v43 = vrot.slane %v16, %v42
  %v44 = vmul.f32 %v29, %v43
  %v45 = vmul.f32 %v30, %v43
  %vm46 = vcmask 261120
  %v47 = vsel %vm46, %v44, 0.0
  %48 = vadd.xlane.f32.xlu0 %v47
  %v49 = vpop.xlane.xlu0 %48
  %v50 = vsel %vm46, %v45, 0.0
  %51 = vadd.xlane.f32.xlu0 %v50
  %v52 = vpop.xlane.xlu0 %51
  %v53 = vmul.f32 %v49, 0.17677669
  %v54 = vmul.f32 %v52, 0.17677669
  %v57 = vcombine.high %v23, %v23
  %v59 = vunpack.c.l.s4 1966171168
  %v60 = vunpack.c.0.s8 %v59
  %v61 = vlaneseq
  %v62 = vshrl.u32 %v61, 7
  %v63 = vsub.s32 %v60, %v62
  %v64 = vrot.slane %v23, %v63
  %v66 = vunpack.c.l.s4 1966171168
  %v67 = vunpack.c.0.s8 %v66
  %v68 = vlaneseq
  %v69 = vshrl.u32 %v68, 7
  %v70 = vsub.s32 %v67, %v69
  %v71 = vrot.slane %v57, %v70
  %v72 = vcombine.high %v64, %v64
  %v73 = vcombine.high %v71, %v71
  %v75 = vunpack.c.l.s4 1966171168
  %v76 = vunpack.c.0.s8 %v75
  %v77 = vlaneseq
  %v78 = vshrl.u32 %v77, 7
  %v79 = vsub.s32 %v76, %v78
  %v80 = vrot.slane %v64, %v79
  %v82 = vunpack.c.l.s4 1966171168
  %v83 = vunpack.c.0.s8 %v82
  %v84 = vlaneseq
  %v85 = vshrl.u32 %v84, 7
  %v86 = vsub.s32 %v83, %v85
  %v87 = vrot.slane %v71, %v86
  %v89 = vunpack.c.l.s4 1966171168
  %v90 = vunpack.c.0.s8 %v89
  %v91 = vlaneseq
  %v92 = vshrl.u32 %v91, 7
  %v93 = vsub.s32 %v90, %v92
  %v94 = vrot.slane %v72, %v93
  %v96 = vunpack.c.l.s4 1966171168
  %v97 = vunpack.c.0.s8 %v96
  %v98 = vlaneseq
  %v99 = vshrl.u32 %v98, 7
  %v100 = vsub.s32 %v97, %v99
  %v101 = vrot.slane %v73, %v100
  %v102 = vcombine.high %v80, %v80
  %v103 = vcombine.high %v87, %v87
  %v104 = vcombine.high %v94, %v94
  %v105 = vcombine.high %v101, %v101
  %v106 = vcombine.high %v24, %v24
  %v108 = vunpack.c.l.s4 1966171168
  %v109 = vunpack.c.0.s8 %v108
  %v110 = vlaneseq
  %v111 = vshrl.u32 %v110, 7
  %v112 = vsub.s32 %v109, %v111
  %v113 = vrot.slane %v24, %v112
  %v115 = vunpack.c.l.s4 1966171168
  %v116 = vunpack.c.0.s8 %v115
  %v117 = vlaneseq
  %v118 = vshrl.u32 %v117, 7
  %v119 = vsub.s32 %v116, %v118
  %v120 = vrot.slane %v106, %v119
  %v121 = vcombine.high %v113, %v113
  %v122 = vcombine.high %v120, %v120
  %v124 = vunpack.c.l.s4 1966171168
  %v125 = vunpack.c.0.s8 %v124
  %v126 = vlaneseq
  %v127 = vshrl.u32 %v126, 7
  %v128 = vsub.s32 %v125, %v127
  %v129 = vrot.slane %v113, %v128
  %v131 = vunpack.c.l.s4 1966171168
  %v132 = vunpack.c.0.s8 %v131
  %v133 = vlaneseq
  %v134 = vshrl.u32 %v133, 7
  %v135 = vsub.s32 %v132, %v134
  %v136 = vrot.slane %v120, %v135
  %v138 = vunpack.c.l.s4 1966171168
  %v139 = vunpack.c.0.s8 %v138
  %v140 = vlaneseq
  %v141 = vshrl.u32 %v140, 7
  %v142 = vsub.s32 %v139, %v141
  %v143 = vrot.slane %v121, %v142
  %v145 = vunpack.c.l.s4 1966171168
  %v146 = vunpack.c.0.s8 %v145
  %v147 = vlaneseq
  %v148 = vshrl.u32 %v147, 7
  %v149 = vsub.s32 %v146, %v148
  %v150 = vrot.slane %v122, %v149
  %v151 = vcombine.high %v129, %v129
  %v152 = vcombine.high %v136, %v136
  %v153 = vcombine.high %v143, %v143
  %v154 = vcombine.high %v150, %v150
  %v172 = vunpack.c.l.s4 1966171168
  %v173 = vunpack.c.0.s8 %v172
  %v174 = vlaneseq
  %v175 = vshrl.u32 %v174, 7
  %v176 = vsub.s32 %v173, %v175
  %v177 = vrot.slane %v16, %v176
  %v179 = vunpack.c.l.s4 1966171168
  %v180 = vunpack.c.0.s8 %v179
  %v181 = vlaneseq
  %v182 = vshrl.u32 %v181, 7
  %v183 = vsub.s32 %v180, %v182
  %v184 = vrot.slane %v177, %v183
  %v185 = vcombine.high %v184, %v184
  %v187 = vmul.f32 %v80, %v185
  %v188 = vmul.f32 %v94, %v185
  %v189 = vmul.f32 %v102, %v185
  %v190 = vmul.f32 %v104, %v185
  %v191 = vmul.f32 %v87, %v185
  %v192 = vmul.f32 %v101, %v185
  %v193 = vmul.f32 %v103, %v185
  %v194 = vmul.f32 %v105, %v185
  %v195 = vmul.f32 %v129, %v185
  %v196 = vmul.f32 %v143, %v185
  %v197 = vmul.f32 %v151, %v185
  %v198 = vmul.f32 %v153, %v185
  %v199 = vmul.f32 %v136, %v185
  %v200 = vmul.f32 %v150, %v185
  %v201 = vmul.f32 %v152, %v185
  %v202 = vmul.f32 %v154, %v185
  %v203 = vsel %vm35, %v187, 0.0
  %204 = vadd.xlane.f32.xlu0 %v203
  %v205 = vpop.xlane.xlu0 %204
  %v206 = vsel %vm35, %v188, 0.0
  %207 = vadd.xlane.f32.xlu0 %v206
  %v208 = vpop.xlane.xlu0 %207
  %v209 = vsel %vm35, %v189, 0.0
  %210 = vadd.xlane.f32.xlu0 %v209
  %v211 = vpop.xlane.xlu0 %210
  %v212 = vsel %vm35, %v190, 0.0
  %213 = vadd.xlane.f32.xlu0 %v212
  %v214 = vpop.xlane.xlu0 %213
  %v215 = vsel %vm35, %v191, 0.0
  %216 = vadd.xlane.f32.xlu0 %v215
  %v217 = vpop.xlane.xlu0 %216
  %v218 = vsel %vm35, %v192, 0.0
  %219 = vadd.xlane.f32.xlu0 %v218
  %v220 = vpop.xlane.xlu0 %219
  %v221 = vsel %vm35, %v193, 0.0
  %222 = vadd.xlane.f32.xlu0 %v221
  %v223 = vpop.xlane.xlu0 %222
  %v224 = vsel %vm35, %v194, 0.0
  %225 = vadd.xlane.f32.xlu0 %v224
  %v226 = vpop.xlane.xlu0 %225
  %v227 = vsel %vm35, %v195, 0.0
  %228 = vadd.xlane.f32.xlu0 %v227
  %v229 = vpop.xlane.xlu0 %228
  %v230 = vsel %vm35, %v196, 0.0
  %231 = vadd.xlane.f32.xlu0 %v230
  %v232 = vpop.xlane.xlu0 %231
  %v233 = vsel %vm35, %v197, 0.0
  %234 = vadd.xlane.f32.xlu0 %v233
  %v235 = vpop.xlane.xlu0 %234
  %v236 = vsel %vm35, %v198, 0.0
  %237 = vadd.xlane.f32.xlu0 %v236
  %v238 = vpop.xlane.xlu0 %237
  %v239 = vsel %vm35, %v199, 0.0
  %240 = vadd.xlane.f32.xlu0 %v239
  %v241 = vpop.xlane.xlu0 %240
  %v242 = vsel %vm35, %v200, 0.0
  %243 = vadd.xlane.f32.xlu0 %v242
  %v244 = vpop.xlane.xlu0 %243
  %v245 = vsel %vm35, %v201, 0.0
  %246 = vadd.xlane.f32.xlu0 %v245
  %v247 = vpop.xlane.xlu0 %246
  %v248 = vsel %vm35, %v202, 0.0
  %249 = vadd.xlane.f32.xlu0 %v248
  %v250 = vpop.xlane.xlu0 %249
  %v251 = vmul.f32 %v205, 0.17677669
  %v252 = vmul.f32 %v208, 0.17677669
  %v253 = vmul.f32 %v211, 0.17677669
  %v254 = vmul.f32 %v214, 0.17677669
  %v255 = vmul.f32 %v217, 0.17677669
  %v256 = vmul.f32 %v220, 0.17677669
  %v257 = vmul.f32 %v223, 0.17677669
  %v258 = vmul.f32 %v226, 0.17677669
  %v259 = vmul.f32 %v229, 0.17677669
  %v260 = vmul.f32 %v232, 0.17677669
  %v261 = vmul.f32 %v235, 0.17677669
  %v262 = vmul.f32 %v238, 0.17677669
  %v263 = vmul.f32 %v241, 0.17677669
  %v264 = vmul.f32 %v244, 0.17677669
  %v265 = vmul.f32 %v247, 0.17677669
  %v266 = vmul.f32 %v250, 0.17677669
  %v267 = vlaneseq
  %v268 = vshrl.u32 %v267, 7
  %v269 = vsub.s32 0, %v268
  %v270 = vrot.slane %v80, %v269
  %v271 = vlaneseq
  %v272 = vshrl.u32 %v271, 7
  %v273 = vsub.s32 0, %v272
  %v274 = vrot.slane %v94, %v273
  %v275 = vlaneseq
  %v276 = vshrl.u32 %v275, 7
  %v277 = vsub.s32 0, %v276
  %v278 = vrot.slane %v102, %v277
  %v279 = vlaneseq
  %v280 = vshrl.u32 %v279, 7
  %v281 = vsub.s32 0, %v280
  %v282 = vrot.slane %v104, %v281
  %v283 = vlaneseq
  %v284 = vshrl.u32 %v283, 7
  %v285 = vsub.s32 0, %v284
  %v286 = vrot.slane %v87, %v285
  %v287 = vlaneseq
  %v288 = vshrl.u32 %v287, 7
  %v289 = vsub.s32 0, %v288
  %v290 = vrot.slane %v101, %v289
  %v291 = vlaneseq
  %v292 = vshrl.u32 %v291, 7
  %v293 = vsub.s32 0, %v292
  %v294 = vrot.slane %v103, %v293
  %v295 = vlaneseq
  %v296 = vshrl.u32 %v295, 7
  %v297 = vsub.s32 0, %v296
  %v298 = vrot.slane %v105, %v297
  %v299 = vlaneseq
  %v300 = vshrl.u32 %v299, 7
  %v301 = vsub.s32 0, %v300
  %v302 = vrot.slane %v129, %v301
  %v303 = vlaneseq
  %v304 = vshrl.u32 %v303, 7
  %v305 = vsub.s32 0, %v304
  %v306 = vrot.slane %v143, %v305
  %v307 = vlaneseq
  %v308 = vshrl.u32 %v307, 7
  %v309 = vsub.s32 0, %v308
  %v310 = vrot.slane %v151, %v309
  %v311 = vlaneseq
  %v312 = vshrl.u32 %v311, 7
  %v313 = vsub.s32 0, %v312
  %v314 = vrot.slane %v153, %v313
  %v315 = vlaneseq
  %v316 = vshrl.u32 %v315, 7
  %v317 = vsub.s32 0, %v316
  %v318 = vrot.slane %v136, %v317
  %v319 = vlaneseq
  %v320 = vshrl.u32 %v319, 7
  %v321 = vsub.s32 0, %v320
  %v322 = vrot.slane %v150, %v321
  %v323 = vlaneseq
  %v324 = vshrl.u32 %v323, 7
  %v325 = vsub.s32 0, %v324
  %v326 = vrot.slane %v152, %v325
  %v327 = vlaneseq
  %v328 = vshrl.u32 %v327, 7
  %v329 = vsub.s32 0, %v328
  %v330 = vrot.slane %v154, %v329
  %v347 = vmul.f32 %v270, %v29
  %v348 = vmul.f32 %v270, %v30
  %v349 = vmul.f32 %v274, %v29
  %v350 = vmul.f32 %v274, %v30
  %v351 = vmul.f32 %v278, %v29
  %v352 = vmul.f32 %v278, %v30
  %v353 = vmul.f32 %v282, %v29
  %v354 = vmul.f32 %v282, %v30
  %v355 = vmul.f32 %v286, %v29
  %v356 = vmul.f32 %v286, %v30
  %v357 = vmul.f32 %v290, %v29
  %v358 = vmul.f32 %v290, %v30
  %v359 = vmul.f32 %v294, %v29
  %v360 = vmul.f32 %v294, %v30
  %v361 = vmul.f32 %v298, %v29
  %v362 = vmul.f32 %v298, %v30
  %v363 = vmul.f32 %v302, %v29
  %v364 = vmul.f32 %v302, %v30
  %v365 = vmul.f32 %v306, %v29
  %v366 = vmul.f32 %v306, %v30
  %v367 = vmul.f32 %v310, %v29
  %v368 = vmul.f32 %v310, %v30
  %v369 = vmul.f32 %v314, %v29
  %v370 = vmul.f32 %v314, %v30
  %v371 = vmul.f32 %v318, %v29
  %v372 = vmul.f32 %v318, %v30
  %v373 = vmul.f32 %v322, %v29
  %v374 = vmul.f32 %v322, %v30
  %v375 = vmul.f32 %v326, %v29
  %v376 = vmul.f32 %v326, %v30
  %v377 = vmul.f32 %v330, %v29
  %v378 = vmul.f32 %v330, %v30
  %v379 = vsel %vm46, %v347, 0.0
  %380 = vadd.xlane.f32.xlu0 %v379
  %v381 = vpop.xlane.xlu0 %380
  %v382 = vsel %vm46, %v348, 0.0
  %383 = vadd.xlane.f32.xlu0 %v382
  %v384 = vpop.xlane.xlu0 %383
  %v385 = vsel %vm46, %v349, 0.0
  %386 = vadd.xlane.f32.xlu0 %v385
  %v387 = vpop.xlane.xlu0 %386
  %v388 = vsel %vm46, %v350, 0.0
  %389 = vadd.xlane.f32.xlu0 %v388
  %v390 = vpop.xlane.xlu0 %389
  %v391 = vsel %vm46, %v351, 0.0
  %392 = vadd.xlane.f32.xlu0 %v391
  %v393 = vpop.xlane.xlu0 %392
  %v394 = vsel %vm46, %v352, 0.0
  %395 = vadd.xlane.f32.xlu0 %v394
  %v396 = vpop.xlane.xlu0 %395
  %v397 = vsel %vm46, %v353, 0.0
  %398 = vadd.xlane.f32.xlu0 %v397
  %v399 = vpop.xlane.xlu0 %398
  %v400 = vsel %vm46, %v354, 0.0
  %401 = vadd.xlane.f32.xlu0 %v400
  %v402 = vpop.xlane.xlu0 %401
  %v403 = vsel %vm46, %v355, 0.0
  %404 = vadd.xlane.f32.xlu0 %v403
  %v405 = vpop.xlane.xlu0 %404
  %v406 = vsel %vm46, %v356, 0.0
  %407 = vadd.xlane.f32.xlu0 %v406
  %v408 = vpop.xlane.xlu0 %407
  %v409 = vsel %vm46, %v357, 0.0
  %410 = vadd.xlane.f32.xlu0 %v409
  %v411 = vpop.xlane.xlu0 %410
  %v412 = vsel %vm46, %v358, 0.0
  %413 = vadd.xlane.f32.xlu0 %v412
  %v414 = vpop.xlane.xlu0 %413
  %v415 = vsel %vm46, %v359, 0.0
  %416 = vadd.xlane.f32.xlu0 %v415
  %v417 = vpop.xlane.xlu0 %416
  %v418 = vsel %vm46, %v360, 0.0
  %419 = vadd.xlane.f32.xlu0 %v418
  %v420 = vpop.xlane.xlu0 %419
  %v421 = vsel %vm46, %v361, 0.0
  %422 = vadd.xlane.f32.xlu0 %v421
  %v423 = vpop.xlane.xlu0 %422
  %v424 = vsel %vm46, %v362, 0.0
  %425 = vadd.xlane.f32.xlu0 %v424
  %v426 = vpop.xlane.xlu0 %425
  %v427 = vsel %vm46, %v363, 0.0
  %428 = vadd.xlane.f32.xlu0 %v427
  %v429 = vpop.xlane.xlu0 %428
  %v430 = vsel %vm46, %v364, 0.0
  %431 = vadd.xlane.f32.xlu0 %v430
  %v432 = vpop.xlane.xlu0 %431
  %v433 = vsel %vm46, %v365, 0.0
  %434 = vadd.xlane.f32.xlu0 %v433
  %v435 = vpop.xlane.xlu0 %434
  %v436 = vsel %vm46, %v366, 0.0
  %437 = vadd.xlane.f32.xlu0 %v436
  %v438 = vpop.xlane.xlu0 %437
  %v439 = vsel %vm46, %v367, 0.0
  %440 = vadd.xlane.f32.xlu0 %v439
  %v441 = vpop.xlane.xlu0 %440
  %v442 = vsel %vm46, %v368, 0.0
  %443 = vadd.xlane.f32.xlu0 %v442
  %v444 = vpop.xlane.xlu0 %443
  %v445 = vsel %vm46, %v369, 0.0
  %446 = vadd.xlane.f32.xlu0 %v445
  %v447 = vpop.xlane.xlu0 %446
  %v448 = vsel %vm46, %v370, 0.0
  %449 = vadd.xlane.f32.xlu0 %v448
  %v450 = vpop.xlane.xlu0 %449
  %v451 = vsel %vm46, %v371, 0.0
  %452 = vadd.xlane.f32.xlu0 %v451
  %v453 = vpop.xlane.xlu0 %452
  %v454 = vsel %vm46, %v372, 0.0
  %455 = vadd.xlane.f32.xlu0 %v454
  %v456 = vpop.xlane.xlu0 %455
  %v457 = vsel %vm46, %v373, 0.0
  %458 = vadd.xlane.f32.xlu0 %v457
  %v459 = vpop.xlane.xlu0 %458
  %v460 = vsel %vm46, %v374, 0.0
  %461 = vadd.xlane.f32.xlu0 %v460
  %v462 = vpop.xlane.xlu0 %461
  %v463 = vsel %vm46, %v375, 0.0
  %464 = vadd.xlane.f32.xlu0 %v463
  %v465 = vpop.xlane.xlu0 %464
  %v466 = vsel %vm46, %v376, 0.0
  %467 = vadd.xlane.f32.xlu0 %v466
  %v468 = vpop.xlane.xlu0 %467
  %v469 = vsel %vm46, %v377, 0.0
  %470 = vadd.xlane.f32.xlu0 %v469
  %v471 = vpop.xlane.xlu0 %470
  %v472 = vsel %vm46, %v378, 0.0
  %473 = vadd.xlane.f32.xlu0 %v472
  %v474 = vpop.xlane.xlu0 %473
  %v475 = vmul.f32 %v381, 0.17677669
  %v476 = vmul.f32 %v384, 0.17677669
  %v477 = vmul.f32 %v387, 0.17677669
  %v478 = vmul.f32 %v390, 0.17677669
  %v479 = vmul.f32 %v393, 0.17677669
  %v480 = vmul.f32 %v396, 0.17677669
  %v481 = vmul.f32 %v399, 0.17677669
  %v482 = vmul.f32 %v402, 0.17677669
  %v483 = vmul.f32 %v405, 0.17677669
  %v484 = vmul.f32 %v408, 0.17677669
  %v485 = vmul.f32 %v411, 0.17677669
  %v486 = vmul.f32 %v414, 0.17677669
  %v487 = vmul.f32 %v417, 0.17677669
  %v488 = vmul.f32 %v420, 0.17677669
  %v489 = vmul.f32 %v423, 0.17677669
  %v490 = vmul.f32 %v426, 0.17677669
  %v491 = vmul.f32 %v429, 0.17677669
  %v492 = vmul.f32 %v432, 0.17677669
  %v493 = vmul.f32 %v435, 0.17677669
  %v494 = vmul.f32 %v438, 0.17677669
  %v495 = vmul.f32 %v441, 0.17677669
  %v496 = vmul.f32 %v444, 0.17677669
  %v497 = vmul.f32 %v447, 0.17677669
  %v498 = vmul.f32 %v450, 0.17677669
  %v499 = vmul.f32 %v453, 0.17677669
  %v500 = vmul.f32 %v456, 0.17677669
  %v501 = vmul.f32 %v459, 0.17677669
  %v502 = vmul.f32 %v462, 0.17677669
  %v503 = vmul.f32 %v465, 0.17677669
  %v504 = vmul.f32 %v468, 0.17677669
  %v505 = vmul.f32 %v471, 0.17677669
  %v506 = vmul.f32 %v474, 0.17677669
  %v509 = vcombine.high %v14, %v14
  %v511 = vunpack.c.l.s4 1966171168
  %v512 = vunpack.c.0.s8 %v511
  %v513 = vlaneseq
  %v514 = vshrl.u32 %v513, 7
  %v515 = vsub.s32 %v512, %v514
  %v516 = vrot.slane %v14, %v515
  %v518 = vunpack.c.l.s4 1966171168
  %v519 = vunpack.c.0.s8 %v518
  %v520 = vlaneseq
  %v521 = vshrl.u32 %v520, 7
  %v522 = vsub.s32 %v519, %v521
  %v523 = vrot.slane %v509, %v522
  %v524 = vcombine.high %v516, %v516
  %v525 = vcombine.high %v523, %v523
  %v527 = vunpack.c.l.s4 1966171168
  %v528 = vunpack.c.0.s8 %v527
  %v529 = vlaneseq
  %v530 = vshrl.u32 %v529, 7
  %v531 = vsub.s32 %v528, %v530
  %v532 = vrot.slane %v516, %v531
  %v534 = vunpack.c.l.s4 1966171168
  %v535 = vunpack.c.0.s8 %v534
  %v536 = vlaneseq
  %v537 = vshrl.u32 %v536, 7
  %v538 = vsub.s32 %v535, %v537
  %v539 = vrot.slane %v523, %v538
  %v541 = vunpack.c.l.s4 1966171168
  %v542 = vunpack.c.0.s8 %v541
  %v543 = vlaneseq
  %v544 = vshrl.u32 %v543, 7
  %v545 = vsub.s32 %v542, %v544
  %v546 = vrot.slane %v524, %v545
  %v548 = vunpack.c.l.s4 1966171168
  %v549 = vunpack.c.0.s8 %v548
  %v550 = vlaneseq
  %v551 = vshrl.u32 %v550, 7
  %v552 = vsub.s32 %v549, %v551
  %v553 = vrot.slane %v525, %v552
  %v554 = vcombine.high %v532, %v532
  %v555 = vcombine.high %v539, %v539
  %v556 = vcombine.high %v546, %v546
  %v557 = vcombine.high %v553, %v553
  %v558 = vcombine.high %v15, %v15
  %v560 = vunpack.c.l.s4 1966171168
  %v561 = vunpack.c.0.s8 %v560
  %v562 = vlaneseq
  %v563 = vshrl.u32 %v562, 7
  %v564 = vsub.s32 %v561, %v563
  %v565 = vrot.slane %v15, %v564
  %v567 = vunpack.c.l.s4 1966171168
  %v568 = vunpack.c.0.s8 %v567
  %v569 = vlaneseq
  %v570 = vshrl.u32 %v569, 7
  %v571 = vsub.s32 %v568, %v570
  %v572 = vrot.slane %v558, %v571
  %v573 = vcombine.high %v565, %v565
  %v574 = vcombine.high %v572, %v572
  %v576 = vunpack.c.l.s4 1966171168
  %v577 = vunpack.c.0.s8 %v576
  %v578 = vlaneseq
  %v579 = vshrl.u32 %v578, 7
  %v580 = vsub.s32 %v577, %v579
  %v581 = vrot.slane %v565, %v580
  %v583 = vunpack.c.l.s4 1966171168
  %v584 = vunpack.c.0.s8 %v583
  %v585 = vlaneseq
  %v586 = vshrl.u32 %v585, 7
  %v587 = vsub.s32 %v584, %v586
  %v588 = vrot.slane %v572, %v587
  %v590 = vunpack.c.l.s4 1966171168
  %v591 = vunpack.c.0.s8 %v590
  %v592 = vlaneseq
  %v593 = vshrl.u32 %v592, 7
  %v594 = vsub.s32 %v591, %v593
  %v595 = vrot.slane %v573, %v594
  %v597 = vunpack.c.l.s4 1966171168
  %v598 = vunpack.c.0.s8 %v597
  %v599 = vlaneseq
  %v600 = vshrl.u32 %v599, 7
  %v601 = vsub.s32 %v598, %v600
  %v602 = vrot.slane %v574, %v601
  %v603 = vcombine.high %v581, %v581
  %v604 = vcombine.high %v588, %v588
  %v605 = vcombine.high %v595, %v595
  %v606 = vcombine.high %v602, %v602
  %v607 = vlaneseq
  %v608 = vshrl.u32 %v607, 7
  %v609 = vsub.s32 0, %v608
  %v610 = vrot.slane %v39, %v609
  %v611 = vmul.f32 %v610, %v14
  %v612 = vmul.f32 %v610, %v15
  %v613 = vadd.f32 %v611, %v53
  %v614 = vadd.f32 %v612, %v54
  %v615 = vlaneseq
  %v616 = vshrl.u32 %v615, 7
  %v617 = vsub.s32 0, %v616
  %v618 = vrot.slane %v532, %v617
  %v619 = vlaneseq
  %v620 = vshrl.u32 %v619, 7
  %v621 = vsub.s32 0, %v620
  %v622 = vrot.slane %v546, %v621
  %v623 = vlaneseq
  %v624 = vshrl.u32 %v623, 7
  %v625 = vsub.s32 0, %v624
  %v626 = vrot.slane %v554, %v625
  %v627 = vlaneseq
  %v628 = vshrl.u32 %v627, 7
  %v629 = vsub.s32 0, %v628
  %v630 = vrot.slane %v556, %v629
  %v631 = vlaneseq
  %v632 = vshrl.u32 %v631, 7
  %v633 = vsub.s32 0, %v632
  %v634 = vrot.slane %v539, %v633
  %v635 = vlaneseq
  %v636 = vshrl.u32 %v635, 7
  %v637 = vsub.s32 0, %v636
  %v638 = vrot.slane %v553, %v637
  %v639 = vlaneseq
  %v640 = vshrl.u32 %v639, 7
  %v641 = vsub.s32 0, %v640
  %v642 = vrot.slane %v555, %v641
  %v643 = vlaneseq
  %v644 = vshrl.u32 %v643, 7
  %v645 = vsub.s32 0, %v644
  %v646 = vrot.slane %v557, %v645
  %v647 = vlaneseq
  %v648 = vshrl.u32 %v647, 7
  %v649 = vsub.s32 0, %v648
  %v650 = vrot.slane %v581, %v649
  %v651 = vlaneseq
  %v652 = vshrl.u32 %v651, 7
  %v653 = vsub.s32 0, %v652
  %v654 = vrot.slane %v595, %v653
  %v655 = vlaneseq
  %v656 = vshrl.u32 %v655, 7
  %v657 = vsub.s32 0, %v656
  %v658 = vrot.slane %v603, %v657
  %v659 = vlaneseq
  %v660 = vshrl.u32 %v659, 7
  %v661 = vsub.s32 0, %v660
  %v662 = vrot.slane %v605, %v661
  %v663 = vlaneseq
  %v664 = vshrl.u32 %v663, 7
  %v665 = vsub.s32 0, %v664
  %v666 = vrot.slane %v588, %v665
  %v667 = vlaneseq
  %v668 = vshrl.u32 %v667, 7
  %v669 = vsub.s32 0, %v668
  %v670 = vrot.slane %v602, %v669
  %v671 = vlaneseq
  %v672 = vshrl.u32 %v671, 7
  %v673 = vsub.s32 0, %v672
  %v674 = vrot.slane %v604, %v673
  %v675 = vlaneseq
  %v676 = vshrl.u32 %v675, 7
  %v677 = vsub.s32 0, %v676
  %v678 = vrot.slane %v606, %v677
  %v695 = vmul.f32 %v618, %v613
  %v696 = vmul.f32 %v618, %v614
  %v697 = vmul.f32 %v622, %v613
  %v698 = vmul.f32 %v622, %v614
  %v699 = vmul.f32 %v626, %v613
  %v700 = vmul.f32 %v626, %v614
  %v701 = vmul.f32 %v630, %v613
  %v702 = vmul.f32 %v630, %v614
  %v703 = vmul.f32 %v634, %v613
  %v704 = vmul.f32 %v634, %v614
  %v705 = vmul.f32 %v638, %v613
  %v706 = vmul.f32 %v638, %v614
  %v707 = vmul.f32 %v642, %v613
  %v708 = vmul.f32 %v642, %v614
  %v709 = vmul.f32 %v646, %v613
  %v710 = vmul.f32 %v646, %v614
  %v711 = vmul.f32 %v650, %v613
  %v712 = vmul.f32 %v650, %v614
  %v713 = vmul.f32 %v654, %v613
  %v714 = vmul.f32 %v654, %v614
  %v715 = vmul.f32 %v658, %v613
  %v716 = vmul.f32 %v658, %v614
  %v717 = vmul.f32 %v662, %v613
  %v718 = vmul.f32 %v662, %v614
  %v719 = vmul.f32 %v666, %v613
  %v720 = vmul.f32 %v666, %v614
  %v721 = vmul.f32 %v670, %v613
  %v722 = vmul.f32 %v670, %v614
  %v723 = vmul.f32 %v674, %v613
  %v724 = vmul.f32 %v674, %v614
  %v725 = vmul.f32 %v678, %v613
  %v726 = vmul.f32 %v678, %v614
  %v727 = vlaneseq
  %v728 = vshrl.u32 %v727, 7
  %v729 = vsub.s32 0, %v728
  %v730 = vrot.slane %v251, %v729
  %v731 = vlaneseq
  %v732 = vshrl.u32 %v731, 7
  %v733 = vsub.s32 0, %v732
  %v734 = vrot.slane %v252, %v733
  %v735 = vlaneseq
  %v736 = vshrl.u32 %v735, 7
  %v737 = vsub.s32 0, %v736
  %v738 = vrot.slane %v253, %v737
  %v739 = vlaneseq
  %v740 = vshrl.u32 %v739, 7
  %v741 = vsub.s32 0, %v740
  %v742 = vrot.slane %v254, %v741
  %v743 = vlaneseq
  %v744 = vshrl.u32 %v743, 7
  %v745 = vsub.s32 0, %v744
  %v746 = vrot.slane %v255, %v745
  %v747 = vlaneseq
  %v748 = vshrl.u32 %v747, 7
  %v749 = vsub.s32 0, %v748
  %v750 = vrot.slane %v256, %v749
  %v751 = vlaneseq
  %v752 = vshrl.u32 %v751, 7
  %v753 = vsub.s32 0, %v752
  %v754 = vrot.slane %v257, %v753
  %v755 = vlaneseq
  %v756 = vshrl.u32 %v755, 7
  %v757 = vsub.s32 0, %v756
  %v758 = vrot.slane %v258, %v757
  %v759 = vlaneseq
  %v760 = vshrl.u32 %v759, 7
  %v761 = vsub.s32 0, %v760
  %v762 = vrot.slane %v259, %v761
  %v763 = vlaneseq
  %v764 = vshrl.u32 %v763, 7
  %v765 = vsub.s32 0, %v764
  %v766 = vrot.slane %v260, %v765
  %v767 = vlaneseq
  %v768 = vshrl.u32 %v767, 7
  %v769 = vsub.s32 0, %v768
  %v770 = vrot.slane %v261, %v769
  %v771 = vlaneseq
  %v772 = vshrl.u32 %v771, 7
  %v773 = vsub.s32 0, %v772
  %v774 = vrot.slane %v262, %v773
  %v775 = vlaneseq
  %v776 = vshrl.u32 %v775, 7
  %v777 = vsub.s32 0, %v776
  %v778 = vrot.slane %v263, %v777
  %v779 = vlaneseq
  %v780 = vshrl.u32 %v779, 7
  %v781 = vsub.s32 0, %v780
  %v782 = vrot.slane %v264, %v781
  %v783 = vlaneseq
  %v784 = vshrl.u32 %v783, 7
  %v785 = vsub.s32 0, %v784
  %v786 = vrot.slane %v265, %v785
  %v787 = vlaneseq
  %v788 = vshrl.u32 %v787, 7
  %v789 = vsub.s32 0, %v788
  %v790 = vrot.slane %v266, %v789
  %v791 = vmul.f32 %v730, %v14
  %v792 = vmul.f32 %v730, %v15
  %v793 = vmul.f32 %v734, %v14
  %v794 = vmul.f32 %v734, %v15
  %v795 = vmul.f32 %v738, %v14
  %v796 = vmul.f32 %v738, %v15
  %v797 = vmul.f32 %v742, %v14
  %v798 = vmul.f32 %v742, %v15
  %v799 = vmul.f32 %v746, %v14
  %v800 = vmul.f32 %v746, %v15
  %v801 = vmul.f32 %v750, %v14
  %v802 = vmul.f32 %v750, %v15
  %v803 = vmul.f32 %v754, %v14
  %v804 = vmul.f32 %v754, %v15
  %v805 = vmul.f32 %v758, %v14
  %v806 = vmul.f32 %v758, %v15
  %v807 = vmul.f32 %v762, %v14
  %v808 = vmul.f32 %v762, %v15
  %v809 = vmul.f32 %v766, %v14
  %v810 = vmul.f32 %v766, %v15
  %v811 = vmul.f32 %v770, %v14
  %v812 = vmul.f32 %v770, %v15
  %v813 = vmul.f32 %v774, %v14
  %v814 = vmul.f32 %v774, %v15
  %v815 = vmul.f32 %v778, %v14
  %v816 = vmul.f32 %v778, %v15
  %v817 = vmul.f32 %v782, %v14
  %v818 = vmul.f32 %v782, %v15
  %v819 = vmul.f32 %v786, %v14
  %v820 = vmul.f32 %v786, %v15
  %v821 = vmul.f32 %v790, %v14
  %v822 = vmul.f32 %v790, %v15
  %v823 = vadd.f32 %v695, %v791
  %v824 = vadd.f32 %v696, %v792
  %v825 = vadd.f32 %v697, %v793
  %v826 = vadd.f32 %v698, %v794
  %v827 = vadd.f32 %v699, %v795
  %v828 = vadd.f32 %v700, %v796
  %v829 = vadd.f32 %v701, %v797
  %v830 = vadd.f32 %v702, %v798
  %v831 = vadd.f32 %v703, %v799
  %v832 = vadd.f32 %v704, %v800
  %v833 = vadd.f32 %v705, %v801
  %v834 = vadd.f32 %v706, %v802
  %v835 = vadd.f32 %v707, %v803
  %v836 = vadd.f32 %v708, %v804
  %v837 = vadd.f32 %v709, %v805
  %v838 = vadd.f32 %v710, %v806
  %v839 = vadd.f32 %v711, %v807
  %v840 = vadd.f32 %v712, %v808
  %v841 = vadd.f32 %v713, %v809
  %v842 = vadd.f32 %v714, %v810
  %v843 = vadd.f32 %v715, %v811
  %v844 = vadd.f32 %v716, %v812
  %v845 = vadd.f32 %v717, %v813
  %v846 = vadd.f32 %v718, %v814
  %v847 = vadd.f32 %v719, %v815
  %v848 = vadd.f32 %v720, %v816
  %v849 = vadd.f32 %v721, %v817
  %v850 = vadd.f32 %v722, %v818
  %v851 = vadd.f32 %v723, %v819
  %v852 = vadd.f32 %v724, %v820
  %v853 = vadd.f32 %v725, %v821
  %v854 = vadd.f32 %v726, %v822
  %v855 = vadd.f32 %v823, %v475
  %v856 = vadd.f32 %v824, %v476
  %v857 = vadd.f32 %v825, %v477
  %v858 = vadd.f32 %v826, %v478
  %v859 = vadd.f32 %v827, %v479
  %v860 = vadd.f32 %v828, %v480
  %v861 = vadd.f32 %v829, %v481
  %v862 = vadd.f32 %v830, %v482
  %v863 = vadd.f32 %v831, %v483
  %v864 = vadd.f32 %v832, %v484
  %v865 = vadd.f32 %v833, %v485
  %v866 = vadd.f32 %v834, %v486
  %v867 = vadd.f32 %v835, %v487
  %v868 = vadd.f32 %v836, %v488
  %v869 = vadd.f32 %v837, %v489
  %v870 = vadd.f32 %v838, %v490
  %v871 = vadd.f32 %v839, %v491
  %v872 = vadd.f32 %v840, %v492
  %v873 = vadd.f32 %v841, %v493
  %v874 = vadd.f32 %v842, %v494
  %v875 = vadd.f32 %v843, %v495
  %v876 = vadd.f32 %v844, %v496
  %v877 = vadd.f32 %v845, %v497
  %v878 = vadd.f32 %v846, %v498
  %v879 = vadd.f32 %v847, %v499
  %v880 = vadd.f32 %v848, %v500
  %v881 = vadd.f32 %v849, %v501
  %v882 = vadd.f32 %v850, %v502
  %v883 = vadd.f32 %v851, %v503
  %v884 = vadd.f32 %v852, %v504
  %v885 = vadd.f32 %v853, %v505
  %v886 = vadd.f32 %v854, %v506
  %vm887 = vcmask 15360
  %v888 = vsel %vm887, %v855, -inf
  %v889 = vsel %vm887, %v856, -inf
  %v890 = vmax.f32 %v888, %v889
  %v891 = vrot.slane %v890, 4
  %v892 = vmax.f32 %v890, %v891
  %v893 = vrot.slane %v892, 2
  %v894 = vmax.f32 %v892, %v893
  %v895 = vrot.slane %v894, 1
  %v896 = vmax.f32 %v894, %v895
  %v897 = vsel %vm887, %v857, -inf
  %v898 = vsel %vm887, %v858, -inf
  %v899 = vmax.f32 %v897, %v898
  %v900 = vrot.slane %v899, 4
  %v901 = vmax.f32 %v899, %v900
  %v902 = vrot.slane %v901, 2
  %v903 = vmax.f32 %v901, %v902
  %v904 = vrot.slane %v903, 1
  %v905 = vmax.f32 %v903, %v904
  %v906 = vsel %vm887, %v859, -inf
  %v907 = vsel %vm887, %v860, -inf
  %v908 = vmax.f32 %v906, %v907
  %v909 = vrot.slane %v908, 4
  %v910 = vmax.f32 %v908, %v909
  %v911 = vrot.slane %v910, 2
  %v912 = vmax.f32 %v910, %v911
  %v913 = vrot.slane %v912, 1
  %v914 = vmax.f32 %v912, %v913
  %v915 = vsel %vm887, %v861, -inf
  %v916 = vsel %vm887, %v862, -inf
  %v917 = vmax.f32 %v915, %v916
  %v918 = vrot.slane %v917, 4
  %v919 = vmax.f32 %v917, %v918
  %v920 = vrot.slane %v919, 2
  %v921 = vmax.f32 %v919, %v920
  %v922 = vrot.slane %v921, 1
  %v923 = vmax.f32 %v921, %v922
  %v924 = vsel %vm887, %v863, -inf
  %v925 = vsel %vm887, %v864, -inf
  %v926 = vmax.f32 %v924, %v925
  %v927 = vrot.slane %v926, 4
  %v928 = vmax.f32 %v926, %v927
  %v929 = vrot.slane %v928, 2
  %v930 = vmax.f32 %v928, %v929
  %v931 = vrot.slane %v930, 1
  %v932 = vmax.f32 %v930, %v931
  %v933 = vsel %vm887, %v865, -inf
  %v934 = vsel %vm887, %v866, -inf
  %v935 = vmax.f32 %v933, %v934
  %v936 = vrot.slane %v935, 4
  %v937 = vmax.f32 %v935, %v936
  %v938 = vrot.slane %v937, 2
  %v939 = vmax.f32 %v937, %v938
  %v940 = vrot.slane %v939, 1
  %v941 = vmax.f32 %v939, %v940
  %v942 = vsel %vm887, %v867, -inf
  %v943 = vsel %vm887, %v868, -inf
  %v944 = vmax.f32 %v942, %v943
  %v945 = vrot.slane %v944, 4
  %v946 = vmax.f32 %v944, %v945
  %v947 = vrot.slane %v946, 2
  %v948 = vmax.f32 %v946, %v947
  %v949 = vrot.slane %v948, 1
  %v950 = vmax.f32 %v948, %v949
  %v951 = vsel %vm887, %v869, -inf
  %v952 = vsel %vm887, %v870, -inf
  %v953 = vmax.f32 %v951, %v952
  %v954 = vrot.slane %v953, 4
  %v955 = vmax.f32 %v953, %v954
  %v956 = vrot.slane %v955, 2
  %v957 = vmax.f32 %v955, %v956
  %v958 = vrot.slane %v957, 1
  %v959 = vmax.f32 %v957, %v958
  %v960 = vsel %vm887, %v871, -inf
  %v961 = vsel %vm887, %v872, -inf
  %v962 = vmax.f32 %v960, %v961
  %v963 = vrot.slane %v962, 4
  %v964 = vmax.f32 %v962, %v963
  %v965 = vrot.slane %v964, 2
  %v966 = vmax.f32 %v964, %v965
  %v967 = vrot.slane %v966, 1
  %v968 = vmax.f32 %v966, %v967
  %v969 = vsel %vm887, %v873, -inf
  %v970 = vsel %vm887, %v874, -inf
  %v971 = vmax.f32 %v969, %v970
  %v972 = vrot.slane %v971, 4
  %v973 = vmax.f32 %v971, %v972
  %v974 = vrot.slane %v973, 2
  %v975 = vmax.f32 %v973, %v974
  %v976 = vrot.slane %v975, 1
  %v977 = vmax.f32 %v975, %v976
  %v978 = vsel %vm887, %v875, -inf
  %v979 = vsel %vm887, %v876, -inf
  %v980 = vmax.f32 %v978, %v979
  %v981 = vrot.slane %v980, 4
  %v982 = vmax.f32 %v980, %v981
  %v983 = vrot.slane %v982, 2
  %v984 = vmax.f32 %v982, %v983
  %v985 = vrot.slane %v984, 1
  %v986 = vmax.f32 %v984, %v985
  %v987 = vsel %vm887, %v877, -inf
  %v988 = vsel %vm887, %v878, -inf
  %v989 = vmax.f32 %v987, %v988
  %v990 = vrot.slane %v989, 4
  %v991 = vmax.f32 %v989, %v990
  %v992 = vrot.slane %v991, 2
  %v993 = vmax.f32 %v991, %v992
  %v994 = vrot.slane %v993, 1
  %v995 = vmax.f32 %v993, %v994
  %v996 = vsel %vm887, %v879, -inf
  %v997 = vsel %vm887, %v880, -inf
  %v998 = vmax.f32 %v996, %v997
  %v999 = vrot.slane %v998, 4
  %v1000 = vmax.f32 %v998, %v999
  %v1001 = vrot.slane %v1000, 2
  %v1002 = vmax.f32 %v1000, %v1001
  %v1003 = vrot.slane %v1002, 1
  %v1004 = vmax.f32 %v1002, %v1003
  %v1005 = vsel %vm887, %v881, -inf
  %v1006 = vsel %vm887, %v882, -inf
  %v1007 = vmax.f32 %v1005, %v1006
  %v1008 = vrot.slane %v1007, 4
  %v1009 = vmax.f32 %v1007, %v1008
  %v1010 = vrot.slane %v1009, 2
  %v1011 = vmax.f32 %v1009, %v1010
  %v1012 = vrot.slane %v1011, 1
  %v1013 = vmax.f32 %v1011, %v1012
  %v1014 = vsel %vm887, %v883, -inf
  %v1015 = vsel %vm887, %v884, -inf
  %v1016 = vmax.f32 %v1014, %v1015
  %v1017 = vrot.slane %v1016, 4
  %v1018 = vmax.f32 %v1016, %v1017
  %v1019 = vrot.slane %v1018, 2
  %v1020 = vmax.f32 %v1018, %v1019
  %v1021 = vrot.slane %v1020, 1
  %v1022 = vmax.f32 %v1020, %v1021
  %v1023 = vsel %vm887, %v885, -inf
  %v1024 = vsel %vm887, %v886, -inf
  %v1025 = vmax.f32 %v1023, %v1024
  %v1026 = vrot.slane %v1025, 4
  %v1027 = vmax.f32 %v1025, %v1026
  %v1028 = vrot.slane %v1027, 2
  %v1029 = vmax.f32 %v1027, %v1028
  %v1030 = vrot.slane %v1029, 1
  %v1031 = vmax.f32 %v1029, %v1030
  %v1032 = vsub.f32 %v855, %v896
  %v1033 = vsub.f32 %v856, %v896
  %v1034 = vsub.f32 %v857, %v905
  %v1035 = vsub.f32 %v858, %v905
  %v1036 = vsub.f32 %v859, %v914
  %v1037 = vsub.f32 %v860, %v914
  %v1038 = vsub.f32 %v861, %v923
  %v1039 = vsub.f32 %v862, %v923
  %v1040 = vsub.f32 %v863, %v932
  %v1041 = vsub.f32 %v864, %v932
  %v1042 = vsub.f32 %v865, %v941
  %v1043 = vsub.f32 %v866, %v941
  %v1044 = vsub.f32 %v867, %v950
  %v1045 = vsub.f32 %v868, %v950
  %v1046 = vsub.f32 %v869, %v959
  %v1047 = vsub.f32 %v870, %v959
  %v1048 = vsub.f32 %v871, %v968
  %v1049 = vsub.f32 %v872, %v968
  %v1050 = vsub.f32 %v873, %v977
  %v1051 = vsub.f32 %v874, %v977
  %v1052 = vsub.f32 %v875, %v986
  %v1053 = vsub.f32 %v876, %v986
  %v1054 = vsub.f32 %v877, %v995
  %v1055 = vsub.f32 %v878, %v995
  %v1056 = vsub.f32 %v879, %v1004
  %v1057 = vsub.f32 %v880, %v1004
  %v1058 = vsub.f32 %v881, %v1013
  %v1059 = vsub.f32 %v882, %v1013
  %v1060 = vsub.f32 %v883, %v1022
  %v1061 = vsub.f32 %v884, %v1022
  %v1062 = vsub.f32 %v885, %v1031
  %v1063 = vsub.f32 %v886, %v1031
  %v1064 = vmul.f32 %v1032, 1.442695
  %v1065 = vpow.pop %v1064
  %v1066 = vmul.f32 %v1033, 1.442695
  %v1067 = vpow.pop %v1066
  %v1068 = vmul.f32 %v1034, 1.442695
  %v1069 = vpow.pop %v1068
  %v1070 = vmul.f32 %v1035, 1.442695
  %v1071 = vpow.pop %v1070
  %v1072 = vmul.f32 %v1036, 1.442695
  %v1073 = vpow.pop %v1072
  %v1074 = vmul.f32 %v1037, 1.442695
  %v1075 = vpow.pop %v1074
  %v1076 = vmul.f32 %v1038, 1.442695
  %v1077 = vpow.pop %v1076
  %v1078 = vmul.f32 %v1039, 1.442695
  %v1079 = vpow.pop %v1078
  %v1080 = vmul.f32 %v1040, 1.442695
  %v1081 = vpow.pop %v1080
  %v1082 = vmul.f32 %v1041, 1.442695
  %v1083 = vpow.pop %v1082
  %v1084 = vmul.f32 %v1042, 1.442695
  %v1085 = vpow.pop %v1084
  %v1086 = vmul.f32 %v1043, 1.442695
  %v1087 = vpow.pop %v1086
  %v1088 = vmul.f32 %v1044, 1.442695
  %v1089 = vpow.pop %v1088
  %v1090 = vmul.f32 %v1045, 1.442695
  %v1091 = vpow.pop %v1090
  %v1092 = vmul.f32 %v1046, 1.442695
  %v1093 = vpow.pop %v1092
  %v1094 = vmul.f32 %v1047, 1.442695
  %v1095 = vpow.pop %v1094
  %v1096 = vmul.f32 %v1048, 1.442695
  %v1097 = vpow.pop %v1096
  %v1098 = vmul.f32 %v1049, 1.442695
  %v1099 = vpow.pop %v1098
  %v1100 = vmul.f32 %v1050, 1.442695
  %v1101 = vpow.pop %v1100
  %v1102 = vmul.f32 %v1051, 1.442695
  %v1103 = vpow.pop %v1102
  %v1104 = vmul.f32 %v1052, 1.442695
  %v1105 = vpow.pop %v1104
  %v1106 = vmul.f32 %v1053, 1.442695
  %v1107 = vpow.pop %v1106
  %v1108 = vmul.f32 %v1054, 1.442695
  %v1109 = vpow.pop %v1108
  %v1110 = vmul.f32 %v1055, 1.442695
  %v1111 = vpow.pop %v1110
  %v1112 = vmul.f32 %v1056, 1.442695
  %v1113 = vpow.pop %v1112
  %v1114 = vmul.f32 %v1057, 1.442695
  %v1115 = vpow.pop %v1114
  %v1116 = vmul.f32 %v1058, 1.442695
  %v1117 = vpow.pop %v1116
  %v1118 = vmul.f32 %v1059, 1.442695
  %v1119 = vpow.pop %v1118
  %v1120 = vmul.f32 %v1060, 1.442695
  %v1121 = vpow.pop %v1120
  %v1122 = vmul.f32 %v1061, 1.442695
  %v1123 = vpow.pop %v1122
  %v1124 = vmul.f32 %v1062, 1.442695
  %v1125 = vpow.pop %v1124
  %v1126 = vmul.f32 %v1063, 1.442695
  %v1127 = vpow.pop %v1126
  %v1128 = vsel %vm887, %v1065, 0.0
  %v1129 = vsel %vm887, %v1067, 0.0
  %v1130 = vadd.f32 %v1128, %v1129
  %v1131 = vrot.slane %v1130, 4
  %v1132 = vadd.f32 %v1130, %v1131
  %v1133 = vrot.slane %v1132, 2
  %v1134 = vadd.f32 %v1132, %v1133
  %v1135 = vrot.slane %v1134, 1
  %v1136 = vadd.f32 %v1134, %v1135
  %v1137 = vsel %vm887, %v1069, 0.0
  %v1138 = vsel %vm887, %v1071, 0.0
  %v1139 = vadd.f32 %v1137, %v1138
  %v1140 = vrot.slane %v1139, 4
  %v1141 = vadd.f32 %v1139, %v1140
  %v1142 = vrot.slane %v1141, 2
  %v1143 = vadd.f32 %v1141, %v1142
  %v1144 = vrot.slane %v1143, 1
  %v1145 = vadd.f32 %v1143, %v1144
  %v1146 = vsel %vm887, %v1073, 0.0
  %v1147 = vsel %vm887, %v1075, 0.0
  %v1148 = vadd.f32 %v1146, %v1147
  %v1149 = vrot.slane %v1148, 4
  %v1150 = vadd.f32 %v1148, %v1149
  %v1151 = vrot.slane %v1150, 2
  %v1152 = vadd.f32 %v1150, %v1151
  %v1153 = vrot.slane %v1152, 1
  %v1154 = vadd.f32 %v1152, %v1153
  %v1155 = vsel %vm887, %v1077, 0.0
  %v1156 = vsel %vm887, %v1079, 0.0
  %v1157 = vadd.f32 %v1155, %v1156
  %v1158 = vrot.slane %v1157, 4
  %v1159 = vadd.f32 %v1157, %v1158
  %v1160 = vrot.slane %v1159, 2
  %v1161 = vadd.f32 %v1159, %v1160
  %v1162 = vrot.slane %v1161, 1
  %v1163 = vadd.f32 %v1161, %v1162
  %v1164 = vsel %vm887, %v1081, 0.0
  %v1165 = vsel %vm887, %v1083, 0.0
  %v1166 = vadd.f32 %v1164, %v1165
  %v1167 = vrot.slane %v1166, 4
  %v1168 = vadd.f32 %v1166, %v1167
  %v1169 = vrot.slane %v1168, 2
  %v1170 = vadd.f32 %v1168, %v1169
  %v1171 = vrot.slane %v1170, 1
  %v1172 = vadd.f32 %v1170, %v1171
  %v1173 = vsel %vm887, %v1085, 0.0
  %v1174 = vsel %vm887, %v1087, 0.0
  %v1175 = vadd.f32 %v1173, %v1174
  %v1176 = vrot.slane %v1175, 4
  %v1177 = vadd.f32 %v1175, %v1176
  %v1178 = vrot.slane %v1177, 2
  %v1179 = vadd.f32 %v1177, %v1178
  %v1180 = vrot.slane %v1179, 1
  %v1181 = vadd.f32 %v1179, %v1180
  %v1182 = vsel %vm887, %v1089, 0.0
  %v1183 = vsel %vm887, %v1091, 0.0
  %v1184 = vadd.f32 %v1182, %v1183
  %v1185 = vrot.slane %v1184, 4
  %v1186 = vadd.f32 %v1184, %v1185
  %v1187 = vrot.slane %v1186, 2
  %v1188 = vadd.f32 %v1186, %v1187
  %v1189 = vrot.slane %v1188, 1
  %v1190 = vadd.f32 %v1188, %v1189
  %v1191 = vsel %vm887, %v1093, 0.0
  %v1192 = vsel %vm887, %v1095, 0.0
  %v1193 = vadd.f32 %v1191, %v1192
  %v1194 = vrot.slane %v1193, 4
  %v1195 = vadd.f32 %v1193, %v1194
  %v1196 = vrot.slane %v1195, 2
  %v1197 = vadd.f32 %v1195, %v1196
  %v1198 = vrot.slane %v1197, 1
  %v1199 = vadd.f32 %v1197, %v1198
  %v1200 = vsel %vm887, %v1097, 0.0
  %v1201 = vsel %vm887, %v1099, 0.0
  %v1202 = vadd.f32 %v1200, %v1201
  %v1203 = vrot.slane %v1202, 4
  %v1204 = vadd.f32 %v1202, %v1203
  %v1205 = vrot.slane %v1204, 2
  %v1206 = vadd.f32 %v1204, %v1205
  %v1207 = vrot.slane %v1206, 1
  %v1208 = vadd.f32 %v1206, %v1207
  %v1209 = vsel %vm887, %v1101, 0.0
  %v1210 = vsel %vm887, %v1103, 0.0
  %v1211 = vadd.f32 %v1209, %v1210
  %v1212 = vrot.slane %v1211, 4
  %v1213 = vadd.f32 %v1211, %v1212
  %v1214 = vrot.slane %v1213, 2
  %v1215 = vadd.f32 %v1213, %v1214
  %v1216 = vrot.slane %v1215, 1
  %v1217 = vadd.f32 %v1215, %v1216
  %v1218 = vsel %vm887, %v1105, 0.0
  %v1219 = vsel %vm887, %v1107, 0.0
  %v1220 = vadd.f32 %v1218, %v1219
  %v1221 = vrot.slane %v1220, 4
  %v1222 = vadd.f32 %v1220, %v1221
  %v1223 = vrot.slane %v1222, 2
  %v1224 = vadd.f32 %v1222, %v1223
  %v1225 = vrot.slane %v1224, 1
  %v1226 = vadd.f32 %v1224, %v1225
  %v1227 = vsel %vm887, %v1109, 0.0
  %v1228 = vsel %vm887, %v1111, 0.0
  %v1229 = vadd.f32 %v1227, %v1228
  %v1230 = vrot.slane %v1229, 4
  %v1231 = vadd.f32 %v1229, %v1230
  %v1232 = vrot.slane %v1231, 2
  %v1233 = vadd.f32 %v1231, %v1232
  %v1234 = vrot.slane %v1233, 1
  %v1235 = vadd.f32 %v1233, %v1234
  %v1236 = vsel %vm887, %v1113, 0.0
  %v1237 = vsel %vm887, %v1115, 0.0
  %v1238 = vadd.f32 %v1236, %v1237
  %v1239 = vrot.slane %v1238, 4
  %v1240 = vadd.f32 %v1238, %v1239
  %v1241 = vrot.slane %v1240, 2
  %v1242 = vadd.f32 %v1240, %v1241
  %v1243 = vrot.slane %v1242, 1
  %v1244 = vadd.f32 %v1242, %v1243
  %v1245 = vsel %vm887, %v1117, 0.0
  %v1246 = vsel %vm887, %v1119, 0.0
  %v1247 = vadd.f32 %v1245, %v1246
  %v1248 = vrot.slane %v1247, 4
  %v1249 = vadd.f32 %v1247, %v1248
  %v1250 = vrot.slane %v1249, 2
  %v1251 = vadd.f32 %v1249, %v1250
  %v1252 = vrot.slane %v1251, 1
  %v1253 = vadd.f32 %v1251, %v1252
  %v1254 = vsel %vm887, %v1121, 0.0
  %v1255 = vsel %vm887, %v1123, 0.0
  %v1256 = vadd.f32 %v1254, %v1255
  %v1257 = vrot.slane %v1256, 4
  %v1258 = vadd.f32 %v1256, %v1257
  %v1259 = vrot.slane %v1258, 2
  %v1260 = vadd.f32 %v1258, %v1259
  %v1261 = vrot.slane %v1260, 1
  %v1262 = vadd.f32 %v1260, %v1261
  %v1263 = vsel %vm887, %v1125, 0.0
  %v1264 = vsel %vm887, %v1127, 0.0
  %v1265 = vadd.f32 %v1263, %v1264
  %v1266 = vrot.slane %v1265, 4
  %v1267 = vadd.f32 %v1265, %v1266
  %v1268 = vrot.slane %v1267, 2
  %v1269 = vadd.f32 %v1267, %v1268
  %v1270 = vrot.slane %v1269, 1
  %v1271 = vadd.f32 %v1269, %v1270
  %v1272 = vmul.f32 %v1065, %v14
  %v1273 = vmul.f32 %v1067, %v15
  %v1274 = vmul.f32 %v1069, %v14
  %v1275 = vmul.f32 %v1071, %v15
  %v1276 = vmul.f32 %v1073, %v14
  %v1277 = vmul.f32 %v1075, %v15
  %v1278 = vmul.f32 %v1077, %v14
  %v1279 = vmul.f32 %v1079, %v15
  %v1280 = vmul.f32 %v1081, %v14
  %v1281 = vmul.f32 %v1083, %v15
  %v1282 = vmul.f32 %v1085, %v14
  %v1283 = vmul.f32 %v1087, %v15
  %v1284 = vmul.f32 %v1089, %v14
  %v1285 = vmul.f32 %v1091, %v15
  %v1286 = vmul.f32 %v1093, %v14
  %v1287 = vmul.f32 %v1095, %v15
  %v1288 = vmul.f32 %v1097, %v14
  %v1289 = vmul.f32 %v1099, %v15
  %v1290 = vmul.f32 %v1101, %v14
  %v1291 = vmul.f32 %v1103, %v15
  %v1292 = vmul.f32 %v1105, %v14
  %v1293 = vmul.f32 %v1107, %v15
  %v1294 = vmul.f32 %v1109, %v14
  %v1295 = vmul.f32 %v1111, %v15
  %v1296 = vmul.f32 %v1113, %v14
  %v1297 = vmul.f32 %v1115, %v15
  %v1298 = vmul.f32 %v1117, %v14
  %v1299 = vmul.f32 %v1119, %v15
  %v1300 = vmul.f32 %v1121, %v14
  %v1301 = vmul.f32 %v1123, %v15
  %v1302 = vmul.f32 %v1125, %v14
  %v1303 = vmul.f32 %v1127, %v15
  %v1304 = vsel %vm887, %v1272, 0.0
  %v1305 = vsel %vm887, %v1273, 0.0
  %v1306 = vadd.f32 %v1304, %v1305
  %v1307 = vrot.slane %v1306, 4
  %v1308 = vadd.f32 %v1306, %v1307
  %v1309 = vrot.slane %v1308, 2
  %v1310 = vadd.f32 %v1308, %v1309
  %v1311 = vrot.slane %v1310, 1
  %v1312 = vadd.f32 %v1310, %v1311
  %v1313 = vsel %vm887, %v1274, 0.0
  %v1314 = vsel %vm887, %v1275, 0.0
  %v1315 = vadd.f32 %v1313, %v1314
  %v1316 = vrot.slane %v1315, 4
  %v1317 = vadd.f32 %v1315, %v1316
  %v1318 = vrot.slane %v1317, 2
  %v1319 = vadd.f32 %v1317, %v1318
  %v1320 = vrot.slane %v1319, 1
  %v1321 = vadd.f32 %v1319, %v1320
  %v1322 = vsel %vm887, %v1276, 0.0
  %v1323 = vsel %vm887, %v1277, 0.0
  %v1324 = vadd.f32 %v1322, %v1323
  %v1325 = vrot.slane %v1324, 4
  %v1326 = vadd.f32 %v1324, %v1325
  %v1327 = vrot.slane %v1326, 2
  %v1328 = vadd.f32 %v1326, %v1327
  %v1329 = vrot.slane %v1328, 1
  %v1330 = vadd.f32 %v1328, %v1329
  %v1331 = vsel %vm887, %v1278, 0.0
  %v1332 = vsel %vm887, %v1279, 0.0
  %v1333 = vadd.f32 %v1331, %v1332
  %v1334 = vrot.slane %v1333, 4
  %v1335 = vadd.f32 %v1333, %v1334
  %v1336 = vrot.slane %v1335, 2
  %v1337 = vadd.f32 %v1335, %v1336
  %v1338 = vrot.slane %v1337, 1
  %v1339 = vadd.f32 %v1337, %v1338
  %v1340 = vsel %vm887, %v1280, 0.0
  %v1341 = vsel %vm887, %v1281, 0.0
  %v1342 = vadd.f32 %v1340, %v1341
  %v1343 = vrot.slane %v1342, 4
  %v1344 = vadd.f32 %v1342, %v1343
  %v1345 = vrot.slane %v1344, 2
  %v1346 = vadd.f32 %v1344, %v1345
  %v1347 = vrot.slane %v1346, 1
  %v1348 = vadd.f32 %v1346, %v1347
  %v1349 = vsel %vm887, %v1282, 0.0
  %v1350 = vsel %vm887, %v1283, 0.0
  %v1351 = vadd.f32 %v1349, %v1350
  %v1352 = vrot.slane %v1351, 4
  %v1353 = vadd.f32 %v1351, %v1352
  %v1354 = vrot.slane %v1353, 2
  %v1355 = vadd.f32 %v1353, %v1354
  %v1356 = vrot.slane %v1355, 1
  %v1357 = vadd.f32 %v1355, %v1356
  %v1358 = vsel %vm887, %v1284, 0.0
  %v1359 = vsel %vm887, %v1285, 0.0
  %v1360 = vadd.f32 %v1358, %v1359
  %v1361 = vrot.slane %v1360, 4
  %v1362 = vadd.f32 %v1360, %v1361
  %v1363 = vrot.slane %v1362, 2
  %v1364 = vadd.f32 %v1362, %v1363
  %v1365 = vrot.slane %v1364, 1
  %v1366 = vadd.f32 %v1364, %v1365
  %v1367 = vsel %vm887, %v1286, 0.0
  %v1368 = vsel %vm887, %v1287, 0.0
  %v1369 = vadd.f32 %v1367, %v1368
  %v1370 = vrot.slane %v1369, 4
  %v1371 = vadd.f32 %v1369, %v1370
  %v1372 = vrot.slane %v1371, 2
  %v1373 = vadd.f32 %v1371, %v1372
  %v1374 = vrot.slane %v1373, 1
  %v1375 = vadd.f32 %v1373, %v1374
  %v1376 = vsel %vm887, %v1288, 0.0
  %v1377 = vsel %vm887, %v1289, 0.0
  %v1378 = vadd.f32 %v1376, %v1377
  %v1379 = vrot.slane %v1378, 4
  %v1380 = vadd.f32 %v1378, %v1379
  %v1381 = vrot.slane %v1380, 2
  %v1382 = vadd.f32 %v1380, %v1381
  %v1383 = vrot.slane %v1382, 1
  %v1384 = vadd.f32 %v1382, %v1383
  %v1385 = vsel %vm887, %v1290, 0.0
  %v1386 = vsel %vm887, %v1291, 0.0
  %v1387 = vadd.f32 %v1385, %v1386
  %v1388 = vrot.slane %v1387, 4
  %v1389 = vadd.f32 %v1387, %v1388
  %v1390 = vrot.slane %v1389, 2
  %v1391 = vadd.f32 %v1389, %v1390
  %v1392 = vrot.slane %v1391, 1
  %v1393 = vadd.f32 %v1391, %v1392
  %v1394 = vsel %vm887, %v1292, 0.0
  %v1395 = vsel %vm887, %v1293, 0.0
  %v1396 = vadd.f32 %v1394, %v1395
  %v1397 = vrot.slane %v1396, 4
  %v1398 = vadd.f32 %v1396, %v1397
  %v1399 = vrot.slane %v1398, 2
  %v1400 = vadd.f32 %v1398, %v1399
  %v1401 = vrot.slane %v1400, 1
  %v1402 = vadd.f32 %v1400, %v1401
  %v1403 = vsel %vm887, %v1294, 0.0
  %v1404 = vsel %vm887, %v1295, 0.0
  %v1405 = vadd.f32 %v1403, %v1404
  %v1406 = vrot.slane %v1405, 4
  %v1407 = vadd.f32 %v1405, %v1406
  %v1408 = vrot.slane %v1407, 2
  %v1409 = vadd.f32 %v1407, %v1408
  %v1410 = vrot.slane %v1409, 1
  %v1411 = vadd.f32 %v1409, %v1410
  %v1412 = vsel %vm887, %v1296, 0.0
  %v1413 = vsel %vm887, %v1297, 0.0
  %v1414 = vadd.f32 %v1412, %v1413
  %v1415 = vrot.slane %v1414, 4
  %v1416 = vadd.f32 %v1414, %v1415
  %v1417 = vrot.slane %v1416, 2
  %v1418 = vadd.f32 %v1416, %v1417
  %v1419 = vrot.slane %v1418, 1
  %v1420 = vadd.f32 %v1418, %v1419
  %v1421 = vsel %vm887, %v1298, 0.0
  %v1422 = vsel %vm887, %v1299, 0.0
  %v1423 = vadd.f32 %v1421, %v1422
  %v1424 = vrot.slane %v1423, 4
  %v1425 = vadd.f32 %v1423, %v1424
  %v1426 = vrot.slane %v1425, 2
  %v1427 = vadd.f32 %v1425, %v1426
  %v1428 = vrot.slane %v1427, 1
  %v1429 = vadd.f32 %v1427, %v1428
  %v1430 = vsel %vm887, %v1300, 0.0
  %v1431 = vsel %vm887, %v1301, 0.0
  %v1432 = vadd.f32 %v1430, %v1431
  %v1433 = vrot.slane %v1432, 4
  %v1434 = vadd.f32 %v1432, %v1433
  %v1435 = vrot.slane %v1434, 2
  %v1436 = vadd.f32 %v1434, %v1435
  %v1437 = vrot.slane %v1436, 1
  %v1438 = vadd.f32 %v1436, %v1437
  %v1439 = vsel %vm887, %v1302, 0.0
  %v1440 = vsel %vm887, %v1303, 0.0
  %v1441 = vadd.f32 %v1439, %v1440
  %v1442 = vrot.slane %v1441, 4
  %v1443 = vadd.f32 %v1441, %v1442
  %v1444 = vrot.slane %v1443, 2
  %v1445 = vadd.f32 %v1443, %v1444
  %v1446 = vrot.slane %v1445, 1
  %v1447 = vadd.f32 %v1445, %v1446
  %v1448 = vrcp.pop %v1136
  %v1449 = vrcp.pop %v1145
  %v1450 = vrcp.pop %v1154
  %v1451 = vrcp.pop %v1163
  %v1452 = vrcp.pop %v1172
  %v1453 = vrcp.pop %v1181
  %v1454 = vrcp.pop %v1190
  %v1455 = vrcp.pop %v1199
  %v1456 = vrcp.pop %v1208
  %v1457 = vrcp.pop %v1217
  %v1458 = vrcp.pop %v1226
  %v1459 = vrcp.pop %v1235
  %v1460 = vrcp.pop %v1244
  %v1461 = vrcp.pop %v1253
  %v1462 = vrcp.pop %v1262
  %v1463 = vrcp.pop %v1271
  %v1464 = vmul.f32 %v1312, %v1448
  %v1465 = vmul.f32 %v1321, %v1449
  %v1466 = vmul.f32 %v1330, %v1450
  %v1467 = vmul.f32 %v1339, %v1451
  %v1468 = vmul.f32 %v1348, %v1452
  %v1469 = vmul.f32 %v1357, %v1453
  %v1470 = vmul.f32 %v1366, %v1454
  %v1471 = vmul.f32 %v1375, %v1455
  %v1472 = vmul.f32 %v1384, %v1456
  %v1473 = vmul.f32 %v1393, %v1457
  %v1474 = vmul.f32 %v1402, %v1458
  %v1475 = vmul.f32 %v1411, %v1459
  %v1476 = vmul.f32 %v1420, %v1460
  %v1477 = vmul.f32 %v1429, %v1461
  %v1478 = vmul.f32 %v1438, %v1462
  %v1479 = vmul.f32 %v1447, %v1463
  %vm1496 = vcmask 1041409
  %v1497 = vsel %vm1496, %v1465, %v1464
  %vm1498 = vcmask 1042434
  %v1499 = vsel %vm1498, %v1466, %v1497
  %vm1500 = vcmask 1043459
  %v1501 = vsel %vm1500, %v1467, %v1499
  %vm1502 = vcmask 1044484
  %v1503 = vsel %vm1502, %v1468, %v1501
  %vm1504 = vcmask 1045509
  %v1505 = vsel %vm1504, %v1469, %v1503
  %vm1506 = vcmask 1046534
  %v1507 = vsel %vm1506, %v1470, %v1505
  %vm1508 = vcmask 1047559
  %v1509 = vsel %vm1508, %v1471, %v1507
  %v1510 = vsel %vm1496, %v1473, %v1472
  %v1511 = vsel %vm1498, %v1474, %v1510
  %v1512 = vsel %vm1500, %v1475, %v1511
  %v1513 = vsel %vm1502, %v1476, %v1512
  %v1514 = vsel %vm1504, %v1477, %v1513
  %v1515 = vsel %vm1506, %v1478, %v1514
  %v1516 = vsel %vm1508, %v1479, %v1515
  %1519 = vst.msk [vmem:[%s3] sm:$0xff] %vm887, %v1509
  %1520 = vst.msk [vmem:[%s3 + $0x8] sm:$0xff] %vm887, %v1516
  // Predicated region
  $region14: #{tpu_custom_call.1} parent=0 // pred_check
    _
  $region15: #{tpu_custom_call.1} parent=0 // pred_check_branch
    %1522 = sbr.rel (0) target = $region17
  $region16: #{tpu_custom_call.1} parent=0 // pred_region
    _
  $region17: #{tpu_custom_call.1} parent=0 // pred_fallthru
    _
  // Predicated region
  $region18: #{tpu_custom_call.1} parent=0 // pred_check
    _
  $region19: #{tpu_custom_call.1} parent=0 // pred_check_branch
    %1524 = sbr.rel (0) target = $region21
  $region20: #{tpu_custom_call.1} parent=0 // pred_region
    _
  $region21: #{tpu_custom_call.1} parent=0 // pred_fallthru
    _

</llo_original>
